<compile_context>
chip_gen: v7x
topology: tpu7x:2x2x1
jax: 0.10.0
libtpu: 0.0.40
codegen_flags: <defaults>
</compile_context>

<pallas_src>
import functools

import jax
import jax.numpy as jnp
from jax.experimental import pallas as pl
from jax.experimental.pallas import tpu as pltpu

_HID = 128   # hidden width 100 padded to lane width
_OUT = 128   # output width 1 padded to lane width


def _disc_kernel(x_ref, w1_ref, b1_ref, w2_ref, b2_ref, w3_ref, b3_ref, o_ref):
    # One batch tile per grid step: three chained MXU matmuls + VPU relu/bias
    # + EUP sigmoid, all on the VMEM-resident weights.
    x = x_ref[...]
    h1 = jnp.dot(x, w1_ref[...], preferred_element_type=jnp.float32) + b1_ref[...]
    h1 = jnp.maximum(h1, 0.0)
    h2 = jnp.dot(h1, w2_ref[...], preferred_element_type=jnp.float32) + b2_ref[...]
    h2 = jnp.maximum(h2, 0.0)
    logits = jnp.dot(h2, w3_ref[...], preferred_element_type=jnp.float32) + b3_ref[...]
    o_ref[...] = jax.nn.sigmoid(logits)


def _round_up(x, m):
    return ((x + m - 1) // m) * m


def _pad_to(x, target, axis):
    pad = target - x.shape[axis]
    if pad == 0:
        return x
    widths = [(0, 0)] * x.ndim
    widths[axis] = (0, pad)
    return jnp.pad(x, widths)


def prepare_params(params):
    """Pad parameters to lane-friendly shapes ONCE (hoisted out of forward).

    Zero-padded rows/cols are inert: zero weight columns produce zero
    pre-activations, relu(0)=0, and the padded sigmoid columns (0.5) are
    sliced off after the kernel.
    """
    w1p = _pad_to(params["w1"], _HID, axis=1)                          # (D, 128)
    b1p = _pad_to(params["b1"].reshape(1, -1), _HID, axis=1)           # (1, 128)
    w2p = _pad_to(_pad_to(params["w2"], _HID, axis=0), _HID, axis=1)   # (128, 128)
    b2p = _pad_to(params["b2"].reshape(1, -1), _HID, axis=1)           # (1, 128)
    w3p = _pad_to(_pad_to(params["w3"], _HID, axis=0), _OUT, axis=1)   # (128, 128)
    b3p = _pad_to(params["b3"].reshape(1, -1), _OUT, axis=1)           # (1, 128)
    return {"w1": w1p, "b1": b1p, "w2": w2p, "b2": b2p, "w3": w3p, "b3": b3p}


@functools.partial(jax.jit, static_argnames=("tb",))
def discriminator_hidden_forward(mol_feature, padded_params, tb=256):
    """mol_feature: (B, fingerprint_dim) float32 -> (B, 1) float32.

    padded_params: output of prepare_params() (pre-padded, computed once).
    """
    B, D = mol_feature.shape

    # Batch tile: multiple of 8 sublanes, capped so tiny batches get one tile.
    tb = min(tb, _round_up(B, 8))
    B_pad = _round_up(B, tb)
    x = mol_feature
    if B_pad != B:
        x = jnp.pad(x, ((0, B_pad - B), (0, 0)))

    grid = (B_pad // tb,)

    out = pl.pallas_call(
        _disc_kernel,
        out_shape=jax.ShapeDtypeStruct((B_pad, _OUT), jnp.float32),
        grid=grid,
        in_specs=[
            # Activations: tiled over the batch grid (double-buffered DMA).
            pl.BlockSpec((tb, D), lambda i: (i, 0)),
            # Weights / biases: same block every step -> VMEM-resident.
            pl.BlockSpec((D, _HID), lambda i: (0, 0)),
            pl.BlockSpec((1, _HID), lambda i: (0, 0)),
            pl.BlockSpec((_HID, _HID), lambda i: (0, 0)),
            pl.BlockSpec((1, _HID), lambda i: (0, 0)),
            pl.BlockSpec((_HID, _OUT), lambda i: (0, 0)),
            pl.BlockSpec((1, _OUT), lambda i: (0, 0)),
        ],
        out_specs=pl.BlockSpec((tb, _OUT), lambda i: (i, 0)),
        compiler_params=pltpu.CompilerParams(
            # Batch tiles are independent: shard across v7x's two TensorCores.
            dimension_semantics=("parallel",),
        ),
    )(
        x,
        padded_params["w1"], padded_params["b1"],
        padded_params["w2"], padded_params["b2"],
        padded_params["w3"], padded_params["b3"],
    )

    return out[:B, :1]


def init_params(key, fingerprint_dim):
    """Deterministic synthetic init mirroring nn.Linear shapes.

    PyTorch stores Linear weight as (out, in); we keep the transposed (in, out)
    layout so the kernel computes x @ W + b directly.
    """
    ks = jax.random.split(key, 6)

    def lin(kw, kb, fan_in, fan_out):
        bound = 1.0 / jnp.sqrt(fan_in)
        w = jax.random.uniform(kw, (fan_in, fan_out), jnp.float32, -bound, bound)
        b = jax.random.uniform(kb, (fan_out,), jnp.float32, -bound, bound)
        return w, b

    w1, b1 = lin(ks[0], ks[1], fingerprint_dim, 100)
    w2, b2 = lin(ks[2], ks[3], 100, 100)
    w3, b3 = lin(ks[4], ks[5], 100, 1)
    return {"w1": w1, "b1": b1, "w2": w2, "b2": b2, "w3": w3, "b3": b3}


def _reference(mol_feature, p):
    h1 = jnp.maximum(mol_feature @ p["w1"] + p["b1"], 0.0)
    h2 = jnp.maximum(h1 @ p["w2"] + p["b2"], 0.0)
    return jax.nn.sigmoid(h2 @ p["w3"] + p["b3"])


if __name__ == "__main__":
    key = jax.random.PRNGKey(0)
    k_x, k_p, k_x2 = jax.random.split(key, 3)

    # Small, module-consistent shapes.
    batch = 2
    fingerprint_dim = 32
    mol_feature = jax.random.normal(k_x, (batch, fingerprint_dim), jnp.float32)
    params = init_params(k_p, fingerprint_dim)
    padded = prepare_params(params)   # pad once, outside the forward path

    out = discriminator_hidden_forward(mol_feature, padded)
    out = jax.block_until_ready(out)
    ref = _reference(mol_feature, params)
    assert out.shape == (batch, 1), out.shape
    assert jnp.allclose(out, ref, atol=1e-5, rtol=1e-5), (out, ref)

    # Exercise the multi-tile batch grid + remainder padding path.
    batch2 = 300
    mol_feature2 = jax.random.normal(k_x2, (batch2, fingerprint_dim), jnp.float32)
    out2 = jax.block_until_ready(discriminator_hidden_forward(mol_feature2, padded))
    ref2 = _reference(mol_feature2, params)
    assert out2.shape == (batch2, 1), out2.shape
    assert jnp.allclose(out2, ref2, atol=1e-5, rtol=1e-5)

    print("KERNEL_OK")
</pallas_src>

<mosaic_0001>
module attributes {stable_mosaic.version = 11 : i64} {
  func.func @_disc_kernel(%arg0: i32, %arg1: memref<8x32xf32, #tpu.memory_space<vmem>>, %arg2: memref<32x128xf32, #tpu.memory_space<vmem>>, %arg3: memref<1x128xf32, #tpu.memory_space<vmem>>, %arg4: memref<128x128xf32, #tpu.memory_space<vmem>>, %arg5: memref<1x128xf32, #tpu.memory_space<vmem>>, %arg6: memref<128x128xf32, #tpu.memory_space<vmem>>, %arg7: memref<1x128xf32, #tpu.memory_space<vmem>>, %arg8: memref<8x128xf32, #tpu.memory_space<vmem>>) attributes {dimension_semantics = [#tpu.dimension_semantics<parallel>], iteration_bounds = array<i64: 1>, scalar_prefetch = 0 : i64, scratch_operands = 0 : i64, tpu.core_type = #tpu.core_type<tc>, window_params = [{transform_indices = @transform_0, window_bounds = array<i64: 8, 32>}, {pipeline_mode = #tpu.pipeline_mode<synchronous>, transform_indices = @transform_1, window_bounds = array<i64: 32, 128>}, {pipeline_mode = #tpu.pipeline_mode<synchronous>, transform_indices = @transform_2, window_bounds = array<i64: 1, 128>}, {pipeline_mode = #tpu.pipeline_mode<synchronous>, transform_indices = @transform_3, window_bounds = array<i64: 128, 128>}, {pipeline_mode = #tpu.pipeline_mode<synchronous>, transform_indices = @transform_4, window_bounds = array<i64: 1, 128>}, {pipeline_mode = #tpu.pipeline_mode<synchronous>, transform_indices = @transform_5, window_bounds = array<i64: 128, 128>}, {pipeline_mode = #tpu.pipeline_mode<synchronous>, transform_indices = @transform_6, window_bounds = array<i64: 1, 128>}, {transform_indices = @transform_7, window_bounds = array<i64: 8, 128>}]} {
    %c0 = arith.constant 0 : index
    %c0_0 = arith.constant 0 : index
    %0 = vector.load %arg1[%c0, %c0_0] : memref<8x32xf32, #tpu.memory_space<vmem>>, vector<8x32xf32>
    %c0_1 = arith.constant 0 : index
    %c0_2 = arith.constant 0 : index
    %1 = vector.load %arg2[%c0_1, %c0_2] : memref<32x128xf32, #tpu.memory_space<vmem>>, vector<32x128xf32>
    %cst = arith.constant dense<0.000000e+00> : vector<8x128xf32>
    %2 = tpu.matmul %0, %1, %cst {dimension_numbers = #tpu.dot_dimension_numbers<[1], [0], [0], [1], [0, 0, 1, 1], [], []>} : vector<8x32xf32>, vector<32x128xf32>, vector<8x128xf32> -> vector<8x128xf32>
    %c0_3 = arith.constant 0 : index
    %c0_4 = arith.constant 0 : index
    %3 = vector.load %arg3[%c0_3, %c0_4] : memref<1x128xf32, #tpu.memory_space<vmem>>, vector<1x128xf32>
    %4 = vector.broadcast %3 : vector<1x128xf32> to vector<8x128xf32>
    %5 = arith.addf %2, %4 : vector<8x128xf32>
    %cst_5 = arith.constant 0.000000e+00 : f32
    %6 = vector.broadcast %cst_5 : f32 to vector<8x128xf32>
    %7 = arith.maximumf %5, %6 : vector<8x128xf32>
    %c0_6 = arith.constant 0 : index
    %c0_7 = arith.constant 0 : index
    %8 = vector.load %arg4[%c0_6, %c0_7] : memref<128x128xf32, #tpu.memory_space<vmem>>, vector<128x128xf32>
    %cst_8 = arith.constant dense<0.000000e+00> : vector<8x128xf32>
    %9 = tpu.matmul %7, %8, %cst_8 {dimension_numbers = #tpu.dot_dimension_numbers<[1], [0], [0], [1], [0, 0, 1, 1], [], []>} : vector<8x128xf32>, vector<128x128xf32>, vector<8x128xf32> -> vector<8x128xf32>
    %c0_9 = arith.constant 0 : index
    %c0_10 = arith.constant 0 : index
    %10 = vector.load %arg5[%c0_9, %c0_10] : memref<1x128xf32, #tpu.memory_space<vmem>>, vector<1x128xf32>
    %11 = vector.broadcast %10 : vector<1x128xf32> to vector<8x128xf32>
    %12 = arith.addf %9, %11 : vector<8x128xf32>
    %cst_11 = arith.constant 0.000000e+00 : f32
    %13 = vector.broadcast %cst_11 : f32 to vector<8x128xf32>
    %14 = arith.maximumf %12, %13 : vector<8x128xf32>
    %c0_12 = arith.constant 0 : index
    %c0_13 = arith.constant 0 : index
    %15 = vector.load %arg6[%c0_12, %c0_13] : memref<128x128xf32, #tpu.memory_space<vmem>>, vector<128x128xf32>
    %cst_14 = arith.constant dense<0.000000e+00> : vector<8x128xf32>
    %16 = tpu.matmul %14, %15, %cst_14 {dimension_numbers = #tpu.dot_dimension_numbers<[1], [0], [0], [1], [0, 0, 1, 1], [], []>} : vector<8x128xf32>, vector<128x128xf32>, vector<8x128xf32> -> vector<8x128xf32>
    %c0_15 = arith.constant 0 : index
    %c0_16 = arith.constant 0 : index
    %17 = vector.load %arg7[%c0_15, %c0_16] : memref<1x128xf32, #tpu.memory_space<vmem>>, vector<1x128xf32>
    %18 = vector.broadcast %17 : vector<1x128xf32> to vector<8x128xf32>
    %19 = arith.addf %16, %18 : vector<8x128xf32>
    %20 = arith.negf %19 : vector<8x128xf32>
    %21 = math.exp %20 : vector<8x128xf32>
    %cst_17 = arith.constant 1.000000e+00 : f32
    %22 = vector.broadcast %cst_17 : f32 to vector<8x128xf32>
    %23 = arith.addf %22, %21 : vector<8x128xf32>
    %24 = arith.divf %22, %23 : vector<8x128xf32>
    %c0_18 = arith.constant 0 : index
    %c0_19 = arith.constant 0 : index
    %25 = vector.load %arg8[%c0_18, %c0_19] : memref<8x128xf32, #tpu.memory_space<vmem>>, vector<8x128xf32>
    tpu.vector_store %arg8[%c0_18, %c0_19], %24 {strides = array<i32>} : memref<8x128xf32, #tpu.memory_space<vmem>>, vector<8x128xf32>,
    return
  }
  func.func @transform_0(%arg0: i32) -> (i32, i32) {
    %c0_i32 = arith.constant 0 : i32
    %c0_i32_0 = arith.constant 0 : i32
    return %arg0, %c0_i32 : i32, i32
  }
  func.func @transform_1(%arg0: i32) -> (i32, i32) {
    %c0_i32 = arith.constant 0 : i32
    %c0_i32_0 = arith.constant 0 : i32
    %c0_i32_1 = arith.constant 0 : i32
    return %c0_i32, %c0_i32_0 : i32, i32
  }
  func.func @transform_2(%arg0: i32) -> (i32, i32) {
    %c0_i32 = arith.constant 0 : i32
    %c0_i32_0 = arith.constant 0 : i32
    %c0_i32_1 = arith.constant 0 : i32
    return %c0_i32, %c0_i32_0 : i32, i32
  }
  func.func @transform_3(%arg0: i32) -> (i32, i32) {
    %c0_i32 = arith.constant 0 : i32
    %c0_i32_0 = arith.constant 0 : i32
    %c0_i32_1 = arith.constant 0 : i32
    return %c0_i32, %c0_i32_0 : i32, i32
  }
  func.func @transform_4(%arg0: i32) -> (i32, i32) {
    %c0_i32 = arith.constant 0 : i32
    %c0_i32_0 = arith.constant 0 : i32
    %c0_i32_1 = arith.constant 0 : i32
    return %c0_i32, %c0_i32_0 : i32, i32
  }
  func.func @transform_5(%arg0: i32) -> (i32, i32) {
    %c0_i32 = arith.constant 0 : i32
    %c0_i32_0 = arith.constant 0 : i32
    %c0_i32_1 = arith.constant 0 : i32
    return %c0_i32, %c0_i32_0 : i32, i32
  }
  func.func @transform_6(%arg0: i32) -> (i32, i32) {
    %c0_i32 = arith.constant 0 : i32
    %c0_i32_0 = arith.constant 0 : i32
    %c0_i32_1 = arith.constant 0 : i32
    return %c0_i32, %c0_i32_0 : i32, i32
  }
  func.func @transform_7(%arg0: i32) -> (i32, i32) {
    %c0_i32 = arith.constant 0 : i32
    %c0_i32_0 = arith.constant 0 : i32
    return %arg0, %c0_i32 : i32, i32
  }
}

</mosaic_0001>

<llo_original>
// kernel: discriminator_hidden_forward.1
$region0: #{discriminator_hidden_forward.1}
  #allocation0 [shape = 'u32[]', space=smem, size = 0x4, offset = 0x4, fixed_abs, tag = 'smem constant byte address 0x4 - core index']
  #allocation1 [shape = 'u32[144,128]{1,0:T(1,128)}', space=vmem, size = 0x12000, scoped, tag = 'internal scratch']
  %s0 = inlined_call_operand.vmem [shape: f32[8,32], index: 0, kind: input, shape index: {}]
  %s1 = inlined_call_operand.hbm [shape: f32[32,128], index: 1, kind: input, shape index: {}]
  %s2 = inlined_call_operand.vmem [shape: f32[1,128], index: 2, kind: input, shape index: {}]
  %s3 = inlined_call_operand.hbm [shape: f32[128,128], index: 3, kind: input, shape index: {}]
  %s4 = inlined_call_operand.vmem [shape: f32[1,128], index: 4, kind: input, shape index: {}]
  %s5 = inlined_call_operand.hbm [shape: f32[128,128], index: 5, kind: input, shape index: {}]
  %s6 = inlined_call_operand.vmem [shape: f32[1,128], index: 6, kind: input, shape index: {}]
  %s7 = inlined_call_operand.vmem [shape: f32[8,128], index: 7, kind: output, shape index: {}]
  %s8 = sld [smem:[#allocation0]]
  $region50: #{discriminator_hidden_forward.1} parent=0
    _
  %s10 = ssub.s32 1, %s8
  %s11 = scalar_select 0, %s10, %s8
  $region1: #{discriminator_hidden_forward.1} parent=0
    #allocation2 [shape = 'u8[16384]{0}', space=vmem, size = 0x4000, scoped, tag = 'input window, operand 1, single buffered']
    #allocation3 [shape = 's32[1]{0}', space=sflag, size = 0x4, scoped, tag = 'scoped memory for discriminator_hidden_forward.1']
    #allocation4 [shape = 'u8[65536]{0}', space=vmem, size = 0x10000, scoped, tag = 'input window, operand 3, single buffered']
    #allocation5 [shape = 's32[1]{0}', space=sflag, size = 0x4, scoped, tag = 'scoped memory for discriminator_hidden_forward.1']
    #allocation6 [shape = 'u8[65536]{0}', space=vmem, size = 0x10000, scoped, tag = 'input window, operand 5, single buffered']
    %12 = vsyncpa [#allocation3], 0
    %13 = vsyncpa [#allocation5], 0
    // Predicated region
    $region2: #{discriminator_hidden_forward.1} parent=1 // pred_check
      _
    $region3: #{discriminator_hidden_forward.1} parent=1 // pred_check_branch
      %15 = sbr.rel (0) target = $region5
    $region4: #{discriminator_hidden_forward.1} parent=1 // pred_region
      _
    $region5: #{discriminator_hidden_forward.1} parent=1 // pred_fallthru
      _
    // Predicated region
    $region6: #{discriminator_hidden_forward.1} parent=1 // pred_check
      _
    $region7: #{discriminator_hidden_forward.1} parent=1 // pred_check_branch
      %17 = sbr.rel (0) target = $region9
    $region8: #{discriminator_hidden_forward.1} parent=1 // pred_region
      %s19 = ssub.s32 512, 512
      %20 = vsyncadd [#allocation3], %s19
      %s21 = sshll.u32 [#allocation2], 4
      %s22 = int_to_ptr.vmem [resolvable:$true] %s21
      %27 = dma.hbm_to_vmem [thread:$0]  %s1, 512, %s22, [#allocation3], 128, 128, 8
    $region9: #{discriminator_hidden_forward.1} parent=1 // pred_fallthru
      _
    // Predicated region
    $region10: #{discriminator_hidden_forward.1} parent=1 // pred_check
      _
    $region11: #{discriminator_hidden_forward.1} parent=1 // pred_check_branch
      %29 = sbr.rel (0) target = $region13
    $region12: #{discriminator_hidden_forward.1} parent=1 // pred_region
      _
    $region13: #{discriminator_hidden_forward.1} parent=1 // pred_fallthru
      _
    // Predicated region
    $region14: #{discriminator_hidden_forward.1} parent=1 // pred_check
      _
    $region15: #{discriminator_hidden_forward.1} parent=1 // pred_check_branch
      %31 = sbr.rel (0) target = $region17
    $region16: #{discriminator_hidden_forward.1} parent=1 // pred_region
      %s33 = ssub.s32 2048, 2048
      %34 = vsyncadd [#allocation5], %s33
      %s35 = sshll.u32 [#allocation4], 4
      %s36 = int_to_ptr.vmem [resolvable:$true] %s35
      %41 = dma.hbm_to_vmem [thread:$0]  %s3, 2048, %s36, [#allocation5], 128, 128, 8
    $region17: #{discriminator_hidden_forward.1} parent=1 // pred_fallthru
      _
    // Predicated region
    $region18: #{discriminator_hidden_forward.1} parent=1 // pred_check
      _
    $region19: #{discriminator_hidden_forward.1} parent=1 // pred_check_branch
      %43 = sbr.rel (0) target = $region21
    $region20: #{discriminator_hidden_forward.1} parent=1 // pred_region
      _
    $region21: #{discriminator_hidden_forward.1} parent=1 // pred_fallthru
      _
    // Predicated region
    $region22: #{discriminator_hidden_forward.1} parent=1 // pred_check
      _
    $region23: #{discriminator_hidden_forward.1} parent=1 // pred_check_branch
      %45 = sbr.rel (0) target = $region25
    $region24: #{discriminator_hidden_forward.1} parent=1 // pred_region
      %s47 = ssub.s32 2048, 2048
      %48 = vsyncadd [#allocation5], %s47
      %s49 = sshll.u32 [#allocation6], 4
      %s50 = int_to_ptr.vmem [resolvable:$true] %s49
      %55 = dma.hbm_to_vmem [thread:$0]  %s5, 2048, %s50, [#allocation5], 128, 128, 8
    $region25: #{discriminator_hidden_forward.1} parent=1 // pred_fallthru
      _
    // Predicated region
    $region26: #{discriminator_hidden_forward.1} parent=1 // pred_check
      _
    $region27: #{discriminator_hidden_forward.1} parent=1 // pred_check_branch
      %57 = sbr.rel (0) target = $region29
    $region28: #{discriminator_hidden_forward.1} parent=1 // pred_region
      _
    $region29: #{discriminator_hidden_forward.1} parent=1 // pred_fallthru
      _
    // Predicated region
    $region30: #{discriminator_hidden_forward.1} parent=1 // pred_check
      _
    $region31: #{discriminator_hidden_forward.1} parent=1 // pred_check_branch
      %59 = sbr.rel (0) target = $region33
    $region32: #{discriminator_hidden_forward.1} parent=1 // pred_region
      %60 = dma.done [#allocation3], 512
    $region33: #{discriminator_hidden_forward.1} parent=1 // pred_fallthru
      _
    // Predicated region
    $region34: #{discriminator_hidden_forward.1} parent=1 // pred_check
      _
    $region35: #{discriminator_hidden_forward.1} parent=1 // pred_check_branch
      %62 = sbr.rel (0) target = $region37
    $region36: #{discriminator_hidden_forward.1} parent=1 // pred_region
      %63 = dma.done [#allocation5], 2048
    $region37: #{discriminator_hidden_forward.1} parent=1 // pred_fallthru
      _
    // Predicated region
    $region38: #{discriminator_hidden_forward.1} parent=1 // pred_check
      _
    $region39: #{discriminator_hidden_forward.1} parent=1 // pred_check_branch
      %65 = sbr.rel (0) target = $region41
    $region40: #{discriminator_hidden_forward.1} parent=1 // pred_region
      %66 = dma.done [#allocation5], 2048
    $region41: #{discriminator_hidden_forward.1} parent=1 // pred_fallthru
      _
    %v67 = vld [vmem:[%s0] sm:$0xff]
    %v68 = vld [vmem:[#allocation2] sm:$0xff]
    %v69 = vld [vmem:[#allocation2 + $0x8] sm:$0xff]
    %v70 = vld [vmem:[#allocation2 + $0x10] sm:$0xff]
    %v71 = vld [vmem:[#allocation2 + $0x18] sm:$0xff]
    %v72 = vld [vmem:[%s2] sm:$0x1]
    %v74 = vlaneseq
    %v75 = vshrl.u32 %v74, 7
    %v76 = vsub.s32 0, %v75
    %v77 = vrot.slane %v72, %v76
    %vm79 = vcmask 261120
    %v81 = vsel %vm79, %v67, 0
    %83 = vmatprep.subr.mxu0 0.0
    %84 = vmatpush1.msra.mxu0 %v68
    %85 = vmatprep.subr.mxu0 0.0
    %86 = vmatpush1.msra.mxu0 %v69
    %87 = vmatprep.subr.mxu0 0.0
    %88 = vmatpush1.msra.mxu0 %v70
    %89 = vmatprep.subr.mxu0 0.0
    %90 = vmatpush1.msra.mxu0 %v71
    %91 = vmatprep.subr.mxu0 0.0
    %92 = vmatpush1.msra.mxu0 0.0
    %93 = vmatprep.subr.mxu0 0.0
    %94 = vmatpush1.msra.mxu0 0.0
    %95 = vmatprep.subr.mxu0 0.0
    %96 = vmatpush1.msra.mxu0 0.0
    %97 = vmatprep.subr.mxu0 0.0
    %98 = vmatpush1.msra.mxu0 0.0
    %99 = vmatprep.subr.mxu0 0.0
    %100 = vmatpush1.msra.mxu0 0.0
    %101 = vmatprep.subr.mxu0 0.0
    %102 = vmatpush1.msra.mxu0 0.0
    %103 = vmatprep.subr.mxu0 0.0
    %104 = vmatpush1.msra.mxu0 0.0
    %105 = vmatprep.subr.mxu0 0.0
    %106 = vmatpush1.msra.mxu0 0.0
    %107 = vmatprep.subr.mxu0 0.0
    %108 = vmatpush1.msra.mxu0 0.0
    %109 = vmatprep.subr.mxu0 0.0
    %110 = vmatpush1.msra.mxu0 0.0
    %111 = vmatprep.subr.mxu0 0.0
    %112 = vmatpush1.msra.mxu0 0.0
    %113 = vmatprep.subr.mxu0 0.0
    %114 = vmatpush1.msra.mxu0 0.0
    %115 = vmatprep.subr.mxu0 0.0
    %116 = vmatpush1.msra.mxu0 0.0
    %117 = vmatprep.subr.mxu0 0.0
    %118 = vmatpush1.msra.mxu0 0.0
    %119 = vmatprep.subr.mxu0 0.0
    %120 = vmatpush1.msra.mxu0 0.0
    %121 = vmatprep.subr.mxu0 0.0
    %122 = vmatpush1.msra.mxu0 0.0
    %123 = vmatprep.subr.mxu0 0.0
    %124 = vmatpush1.msra.mxu0 0.0
    %125 = vmatprep.subr.mxu0 0.0
    %126 = vmatpush1.msra.mxu0 0.0
    %127 = vmatprep.subr.mxu0 0.0
    %128 = vmatpush1.msra.mxu0 0.0
    %129 = vmatprep.subr.mxu0 0.0
    %130 = vmatpush1.msra.mxu0 0.0
    %131 = vmatprep.subr.mxu0 0.0
    %132 = vmatpush1.msra.mxu0 0.0
    %133 = vmatprep.subr.mxu0 0.0
    %134 = vmatpush1.msra.mxu0 0.0
    %135 = vmatprep.subr.mxu0 0.0
    %136 = vmatpush1.msra.mxu0 0.0
    %137 = vmatprep.subr.mxu0 0.0
    %138 = vmatpush1.msra.mxu0 0.0
    %139 = vmatprep.subr.mxu0 0.0
    %140 = vmatpush1.msra.mxu0 0.0
    %141 = vmatprep.subr.mxu0 0.0
    %142 = vmatpush1.msra.mxu0 0.0
    %143 = vmatprep.subr.mxu0 0.0
    %144 = vmatpush1.msra.mxu0 0.0
    %145 = vmatprep.subr.mxu0 0.0
    %146 = vmatpush1.msra.mxu0 0.0
    %147 = vmatprep.mubr.f32.mxu0 0.0
    %148 = vmatmul.mubr.f32.gmra.mrb[0].mxu0 %v81
    %v149 = vpop.f32.mrb[0].mxu0
    %v150 = vadd.f32 %v77, %v149
    %v151 = vpop.f32.mrb[0].mxu0
    %152 = vdwg.mxu0
    %v153 = vmax.f32 %v150, 0.0
    %v154 = vld [vmem:[#allocation4] sm:$0xff]
    %v155 = vld [vmem:[#allocation4 + $0x8] sm:$0xff]
    %v156 = vld [vmem:[#allocation4 + $0x10] sm:$0xff]
    %v157 = vld [vmem:[#allocation4 + $0x18] sm:$0xff]
    %v158 = vld [vmem:[#allocation4 + $0x20] sm:$0xff]
    %v159 = vld [vmem:[#allocation4 + $0x28] sm:$0xff]
    %v160 = vld [vmem:[#allocation4 + $0x30] sm:$0xff]
    %v161 = vld [vmem:[#allocation4 + $0x38] sm:$0xff]
    %v162 = vld [vmem:[#allocation4 + $0x40] sm:$0xff]
    %v163 = vld [vmem:[#allocation4 + $0x48] sm:$0xff]
    %v164 = vld [vmem:[#allocation4 + $0x50] sm:$0xff]
    %v165 = vld [vmem:[#allocation4 + $0x58] sm:$0xff]
    %v166 = vld [vmem:[#allocation4 + $0x60] sm:$0xff]
    %v167 = vld [vmem:[#allocation4 + $0x68] sm:$0xff]
    %v168 = vld [vmem:[#allocation4 + $0x70] sm:$0xff]
    %v169 = vld [vmem:[#allocation4 + $0x78] sm:$0xff]
    %v170 = vld [vmem:[%s4] sm:$0x1]
    %v172 = vlaneseq
    %v173 = vshrl.u32 %v172, 7
    %v174 = vsub.s32 0, %v173
    %v175 = vrot.slane %v170, %v174
    %177 = vmatprep.subr.mxu0 0.0
    %178 = vmatpush1.msra.mxu0 %v154
    %179 = vmatprep.subr.mxu0 0.0
    %180 = vmatpush1.msra.mxu0 %v155
    %181 = vmatprep.subr.mxu0 0.0
    %182 = vmatpush1.msra.mxu0 %v156
    %183 = vmatprep.subr.mxu0 0.0
    %184 = vmatpush1.msra.mxu0 %v157
    %185 = vmatprep.subr.mxu0 0.0
    %186 = vmatpush1.msra.mxu0 %v158
    %187 = vmatprep.subr.mxu0 0.0
    %188 = vmatpush1.msra.mxu0 %v159
    %189 = vmatprep.subr.mxu0 0.0
    %190 = vmatpush1.msra.mxu0 %v160
    %191 = vmatprep.subr.mxu0 0.0
    %192 = vmatpush1.msra.mxu0 %v161
    %193 = vmatprep.subr.mxu0 0.0
    %194 = vmatpush1.msra.mxu0 %v162
    %195 = vmatprep.subr.mxu0 0.0
    %196 = vmatpush1.msra.mxu0 %v163
    %197 = vmatprep.subr.mxu0 0.0
    %198 = vmatpush1.msra.mxu0 %v164
    %199 = vmatprep.subr.mxu0 0.0
    %200 = vmatpush1.msra.mxu0 %v165
    %201 = vmatprep.subr.mxu0 0.0
    %202 = vmatpush1.msra.mxu0 %v166
    %203 = vmatprep.subr.mxu0 0.0
    %204 = vmatpush1.msra.mxu0 %v167
    %205 = vmatprep.subr.mxu0 0.0
    %206 = vmatpush1.msra.mxu0 %v168
    %207 = vmatprep.subr.mxu0 0.0
    %208 = vmatpush1.msra.mxu0 %v169
    %209 = vmatprep.subr.mxu0 0.0
    %210 = vmatpush1.msra.mxu0 0.0
    %211 = vmatprep.subr.mxu0 0.0
    %212 = vmatpush1.msra.mxu0 0.0
    %213 = vmatprep.subr.mxu0 0.0
    %214 = vmatpush1.msra.mxu0 0.0
    %215 = vmatprep.subr.mxu0 0.0
    %216 = vmatpush1.msra.mxu0 0.0
    %217 = vmatprep.subr.mxu0 0.0
    %218 = vmatpush1.msra.mxu0 0.0
    %219 = vmatprep.subr.mxu0 0.0
    %220 = vmatpush1.msra.mxu0 0.0
    %221 = vmatprep.subr.mxu0 0.0
    %222 = vmatpush1.msra.mxu0 0.0
    %223 = vmatprep.subr.mxu0 0.0
    %224 = vmatpush1.msra.mxu0 0.0
    %225 = vmatprep.subr.mxu0 0.0
    %226 = vmatpush1.msra.mxu0 0.0
    %227 = vmatprep.subr.mxu0 0.0
    %228 = vmatpush1.msra.mxu0 0.0
    %229 = vmatprep.subr.mxu0 0.0
    %230 = vmatpush1.msra.mxu0 0.0
    %231 = vmatprep.subr.mxu0 0.0
    %232 = vmatpush1.msra.mxu0 0.0
    %233 = vmatprep.subr.mxu0 0.0
    %234 = vmatpush1.msra.mxu0 0.0
    %235 = vmatprep.subr.mxu0 0.0
    %236 = vmatpush1.msra.mxu0 0.0
    %237 = vmatprep.subr.mxu0 0.0
    %238 = vmatpush1.msra.mxu0 0.0
    %239 = vmatprep.subr.mxu0 0.0
    %240 = vmatpush1.msra.mxu0 0.0
    %241 = vmatprep.mubr.f32.mxu0 0.0
    %242 = vmatmul.mubr.f32.gmra.mrb[0].mxu0 %v153
    %v243 = vpop.f32.mrb[0].mxu0
    %v244 = vadd.f32 %v175, %v243
    %v245 = vpop.f32.mrb[0].mxu0
    %246 = vdwg.mxu0
    %v247 = vmax.f32 %v244, 0.0
    %v248 = vld [vmem:[#allocation6] sm:$0xff]
    %v249 = vld [vmem:[#allocation6 + $0x8] sm:$0xff]
    %v250 = vld [vmem:[#allocation6 + $0x10] sm:$0xff]
    %v251 = vld [vmem:[#allocation6 + $0x18] sm:$0xff]
    %v252 = vld [vmem:[#allocation6 + $0x20] sm:$0xff]
    %v253 = vld [vmem:[#allocation6 + $0x28] sm:$0xff]
    %v254 = vld [vmem:[#allocation6 + $0x30] sm:$0xff]
    %v255 = vld [vmem:[#allocation6 + $0x38] sm:$0xff]
    %v256 = vld [vmem:[#allocation6 + $0x40] sm:$0xff]
    %v257 = vld [vmem:[#allocation6 + $0x48] sm:$0xff]
    %v258 = vld [vmem:[#allocation6 + $0x50] sm:$0xff]
    %v259 = vld [vmem:[#allocation6 + $0x58] sm:$0xff]
    %v260 = vld [vmem:[#allocation6 + $0x60] sm:$0xff]
    %v261 = vld [vmem:[#allocation6 + $0x68] sm:$0xff]
    %v262 = vld [vmem:[#allocation6 + $0x70] sm:$0xff]
    %v263 = vld [vmem:[#allocation6 + $0x78] sm:$0xff]
    %v264 = vld [vmem:[%s6] sm:$0x1]
    %v266 = vlaneseq
    %v267 = vshrl.u32 %v266, 7
    %v268 = vsub.s32 0, %v267
    %v269 = vrot.slane %v264, %v268
    %271 = vmatprep.subr.mxu0 0.0
    %272 = vmatpush1.msra.mxu0 %v248
    %273 = vmatprep.subr.mxu0 0.0
    %274 = vmatpush1.msra.mxu0 %v249
    %275 = vmatprep.subr.mxu0 0.0
    %276 = vmatpush1.msra.mxu0 %v250
    %277 = vmatprep.subr.mxu0 0.0
    %278 = vmatpush1.msra.mxu0 %v251
    %279 = vmatprep.subr.mxu0 0.0
    %280 = vmatpush1.msra.mxu0 %v252
    %281 = vmatprep.subr.mxu0 0.0
    %282 = vmatpush1.msra.mxu0 %v253
    %283 = vmatprep.subr.mxu0 0.0
    %284 = vmatpush1.msra.mxu0 %v254
    %285 = vmatprep.subr.mxu0 0.0
    %286 = vmatpush1.msra.mxu0 %v255
    %287 = vmatprep.subr.mxu0 0.0
    %288 = vmatpush1.msra.mxu0 %v256
    %289 = vmatprep.subr.mxu0 0.0
    %290 = vmatpush1.msra.mxu0 %v257
    %291 = vmatprep.subr.mxu0 0.0
    %292 = vmatpush1.msra.mxu0 %v258
    %293 = vmatprep.subr.mxu0 0.0
    %294 = vmatpush1.msra.mxu0 %v259
    %295 = vmatprep.subr.mxu0 0.0
    %296 = vmatpush1.msra.mxu0 %v260
    %297 = vmatprep.subr.mxu0 0.0
    %298 = vmatpush1.msra.mxu0 %v261
    %299 = vmatprep.subr.mxu0 0.0
    %300 = vmatpush1.msra.mxu0 %v262
    %301 = vmatprep.subr.mxu0 0.0
    %302 = vmatpush1.msra.mxu0 %v263
    %303 = vmatprep.subr.mxu0 0.0
    %304 = vmatpush1.msra.mxu0 0.0
    %305 = vmatprep.subr.mxu0 0.0
    %306 = vmatpush1.msra.mxu0 0.0
    %307 = vmatprep.subr.mxu0 0.0
    %308 = vmatpush1.msra.mxu0 0.0
    %309 = vmatprep.subr.mxu0 0.0
    %310 = vmatpush1.msra.mxu0 0.0
    %311 = vmatprep.subr.mxu0 0.0
    %312 = vmatpush1.msra.mxu0 0.0
    %313 = vmatprep.subr.mxu0 0.0
    %314 = vmatpush1.msra.mxu0 0.0
    %315 = vmatprep.subr.mxu0 0.0
    %316 = vmatpush1.msra.mxu0 0.0
    %317 = vmatprep.subr.mxu0 0.0
    %318 = vmatpush1.msra.mxu0 0.0
    %319 = vmatprep.subr.mxu0 0.0
    %320 = vmatpush1.msra.mxu0 0.0
    %321 = vmatprep.subr.mxu0 0.0
    %322 = vmatpush1.msra.mxu0 0.0
    %323 = vmatprep.subr.mxu0 0.0
    %324 = vmatpush1.msra.mxu0 0.0
    %325 = vmatprep.subr.mxu0 0.0
    %326 = vmatpush1.msra.mxu0 0.0
    %327 = vmatprep.subr.mxu0 0.0
    %328 = vmatpush1.msra.mxu0 0.0
    %329 = vmatprep.subr.mxu0 0.0
    %330 = vmatpush1.msra.mxu0 0.0
    %331 = vmatprep.subr.mxu0 0.0
    %332 = vmatpush1.msra.mxu0 0.0
    %333 = vmatprep.subr.mxu0 0.0
    %334 = vmatpush1.msra.mxu0 0.0
    %335 = vmatprep.mubr.f32.mxu0 0.0
    %336 = vmatmul.mubr.f32.gmra.mrb[0].mxu0 %v247
    %v337 = vpop.f32.mrb[0].mxu0
    %v338 = vadd.f32 %v269, %v337
    %v339 = vpop.f32.mrb[0].mxu0
    %340 = vdwg.mxu0
    %v341 = vxor.u32 %v338, 2147483648
    %v342 = vmul.f32 %v341, 1.442695
    %v343 = vpow.pop %v342
    %v344 = vadd.f32 %v343, 1.0
    %v345 = vrcp.pop %v344
    %v346 = vmul.f32 1.0, %v345
    %347 = vst [vmem:[%s7] sm:$0xff] %v346
    // Predicated region
    $region42: #{discriminator_hidden_forward.1} parent=1 // pred_check
      _
    $region43: #{discriminator_hidden_forward.1} parent=1 // pred_check_branch
      %349 = sbr.rel (0) target = $region45
    $region44: #{discriminator_hidden_forward.1} parent=1 // pred_region
      _
    $region45: #{discriminator_hidden_forward.1} parent=1 // pred_fallthru
      _
    // Predicated region
    $region46: #{discriminator_hidden_forward.1} parent=1 // pred_check
      _
    $region47: #{discriminator_hidden_forward.1} parent=1 // pred_check_branch
      %351 = sbr.rel (0) target = $region49
    $region48: #{discriminator_hidden_forward.1} parent=1 // pred_region
      _
    $region49: #{discriminator_hidden_forward.1} parent=1 // pred_fallthru
      _
    %352 = vsyncpa [#allocation3], 1
    %353 = vsyncpa [#allocation5], 1

</llo_original>
